<compile_context>
chip_gen: v7x
topology: tpu7x:2x2x1
jax: 0.10.0
libtpu: 0.0.40
codegen_flags: <defaults>
</compile_context>

<pallas_src>
import functools

import jax
import jax.numpy as jnp
from jax import lax
from jax.experimental import pallas as pl
from jax.experimental.pallas import tpu as pltpu

BN_EPS = 1e-5  # PyTorch BatchNorm1d default


def _conv_bn_relu_kernel(x_ref, w_ref, p_ref, o_ref, xcat_ref, *,
                         n_batch, seg_len, in_len, out_len, k_size, pad):
    """One C_out block of fused Conv1d -> BatchNorm1d(batch stats) -> ReLU.

    x_ref    : (C_in, N*seg_len)   lane-dense input slab, original dtype
    w_ref    : (c_blk, K*C_in)     conv weight, tap-major contraction order
    p_ref    : (c_blk, 2)          packed [gamma, beta]
    o_ref    : (c_blk, N*seg_len)  lane-dense output slab (float32)
    xcat_ref : (K*C_in, N*seg_len) VMEM scratch for the im2col slab
    """
    c_in, nl = x_ref.shape

    # `x = x.to(torch.float32)` happens here, AFTER the DMA, so HBM traffic
    # stays in the input dtype (bf16 inputs are carried narrow to VMEM).
    x = x_ref[...].astype(jnp.float32)

    # lane index within each length-seg_len batch segment (hoisted out of the
    # tap loop -- JAX does not CSE broadcasts/iotas).
    lane_in_seg = lax.broadcasted_iota(jnp.int32, (c_in, nl), 1) % seg_len

    # Assemble x_cat[(k, i), n*seg_len + l] = x[n, i, l + k - pad]
    # (zero outside the real data range [0, in_len)) with K lane rotations
    # (XLU) + masks (VPU select), written into VMEM scratch.
    for k in range(k_size):                      # K is small & static: unrolled
        s = k - pad                              # static per-tap shift
        slab = x
        if s != 0:
            # want slab[p] = x[p + s]  ->  np.roll semantics with shift = -s
            slab = pltpu.roll(slab, shift=(-s) % nl, axis=1)
        if s < 0 or s > in_len - seg_len:
            # conv zero-padding + "don't leak across batch segments" mask
            valid = (lane_in_seg >= -s) & (lane_in_seg < in_len - s)
            slab = jnp.where(valid, slab, 0.0)
        xcat_ref[k * c_in:(k + 1) * c_in, :] = slab

    # ---- Conv1d as ONE big MXU matmul ------------------------------------
    w = w_ref[...].astype(jnp.float32)                       # (c_blk, K*C_in)
    y = jnp.dot(w, xcat_ref[...],
                preferred_element_type=jnp.float32)          # (c_blk, N*seg)
    # NOTE: conv bias intentionally omitted -- it cancels exactly under
    # training-mode BatchNorm (mean subtracts it back out).

    # ---- BatchNorm1d, training-mode batch stats, single pass --------------
    inv_cnt = 1.0 / float(n_batch * out_len)                 # precomputed 1/(N*L_out)
    ym = y
    if out_len < seg_len:
        # exclude lanes past the true output length from the statistics
        out_valid = (lax.broadcasted_iota(jnp.int32, y.shape, 1) % seg_len) < out_len
        ym = jnp.where(out_valid, y, 0.0)
    s1 = jnp.sum(ym, axis=1, keepdims=True)                  # (c_blk, 1) XLU reduce
    s2 = jnp.sum(ym * ym, axis=1, keepdims=True)
    mean = s1 * inv_cnt
    var = s2 * inv_cnt - mean * mean                         # biased var (PyTorch norm)
    inv_std = lax.rsqrt(var + BN_EPS)                        # EUP

    gamma = p_ref[:, 0:1]
    beta = p_ref[:, 1:2]
    scale = gamma * inv_std                                  # fold gamma into scale
    shift = beta - mean * scale                              # fold mean/beta into shift

    # ---- normalize + affine + ReLU: one FMA + max, lane-dense store -------
    o_ref[...] = jnp.maximum(y * scale + shift, 0.0)


def convolution_block(x, w, b, gamma, beta, padding):
    """ConvolutionBlock forward. x: (N, C_in, L) -> (N, C_out, L_out) float32."""
    del b  # conv bias cancels exactly under training-mode BatchNorm
    n, c_in, in_len = x.shape
    c_out, _, k_size = w.shape
    out_len = in_len + 2 * padding - k_size + 1
    assert out_len > 0, "invalid conv geometry"
    seg_len = max(in_len, out_len)               # per-batch lane segment length

    # ---- wrapper-side layout plumbing (original dtype, no f32 cast) -------
    xt = jnp.transpose(x, (1, 0, 2))             # (C_in, N, L)
    if seg_len > in_len:                         # only when padding > 'same'
        xt = jnp.pad(xt, ((0, 0), (0, 0), (0, seg_len - in_len)))
    x2 = xt.reshape(c_in, n * seg_len)           # lane-dense input slab

    # weight -> (C_out, K*C_in), tap-major to match the in-kernel slab order
    w2 = jnp.transpose(w.astype(jnp.float32), (0, 2, 1)).reshape(c_out, k_size * c_in)
    # pack the per-channel BN affine params into a single small VMEM tile
    params = jnp.stack([gamma.astype(jnp.float32),
                        beta.astype(jnp.float32)], axis=1)   # (C_out, 2)

    # ---- grid over C_out blocks (channels independent for conv + BN) ------
    if c_out > 128 and c_out % 128 == 0:
        c_blk = 128
    else:
        c_blk = c_out
    grid = (c_out // c_blk,)
    nl = n * seg_len

    kernel = functools.partial(
        _conv_bn_relu_kernel,
        n_batch=n, seg_len=seg_len, in_len=in_len,
        out_len=out_len, k_size=k_size, pad=padding)

    y2 = pl.pallas_call(
        kernel,
        out_shape=jax.ShapeDtypeStruct((c_out, nl), jnp.float32),
        grid_spec=pltpu.PrefetchScalarGridSpec(
            num_scalar_prefetch=0,
            grid=grid,
            in_specs=[
                # input slab: same block every step -> stays resident in VMEM
                pl.BlockSpec((c_in, nl), lambda j: (0, 0)),
                pl.BlockSpec((c_blk, k_size * c_in), lambda j: (j, 0)),
                pl.BlockSpec((c_blk, 2), lambda j: (j, 0)),
            ],
            out_specs=pl.BlockSpec((c_blk, nl), lambda j: (j, 0)),
            scratch_shapes=[pltpu.VMEM((k_size * c_in, nl), jnp.float32)],
        ),
        compiler_params=pltpu.CompilerParams(
            # C_out blocks are fully independent -> shard across both v7x TCs
            dimension_semantics=("parallel",),
            # explicit scoped-VMEM budget; safe on v5e/v6e (128 MiB) and v7x (64 MiB)
            vmem_limit_bytes=32 * 1024 * 1024,
        ),
    )(x2, w2, params)

    # back to PyTorch layout (N, C_out, L_out) outside the kernel
    y = y2.reshape(c_out, n, seg_len)[:, :, :out_len]
    return jnp.transpose(y, (1, 0, 2))


def reference(x, w, b, gamma, beta, padding):
    """Pure-JAX reference with the PyTorch module's forward semantics."""
    x = x.astype(jnp.float32)
    y = lax.conv_general_dilated(
        x, w.astype(jnp.float32),
        window_strides=(1,), padding=[(padding, padding)],
        dimension_numbers=("NCH", "OIH", "NCH"))
    y = y + b.astype(jnp.float32)[None, :, None]
    mean = y.mean(axis=(0, 2), keepdims=True)
    var = ((y - mean) ** 2).mean(axis=(0, 2), keepdims=True)
    y = (y - mean) / jnp.sqrt(var + BN_EPS)
    y = y * gamma[None, :, None] + beta[None, :, None]
    return jnp.maximum(y, 0.0)


if __name__ == "__main__":
    # small shapes consistent with the module; L chosen so N*L = 128 (lane-dense)
    N, C_in, C_out, L, K = 2, 4, 8, 64, 3

    key = jax.random.PRNGKey(0)
    kx, kw, kb, kg, kbe = jax.random.split(key, 5)

    x = jax.random.normal(kx, (N, C_in, L), dtype=jnp.float32)
    # PyTorch-style Conv1d init: U(-bound, bound), bound = 1/sqrt(C_in*K)
    bound = 1.0 / (C_in * K) ** 0.5
    w = jax.random.uniform(kw, (C_out, C_in, K), jnp.float32, -bound, bound)
    b = jax.random.uniform(kb, (C_out,), jnp.float32, -bound, bound)
    gamma = 1.0 + 0.1 * jax.random.normal(kg, (C_out,), dtype=jnp.float32)
    beta = 0.1 * jax.random.normal(kbe, (C_out,), dtype=jnp.float32)

    # pad=1: 'same' conv (fully lane-dense fast path); pad=0: exercises the
    # L_out < L masking path.
    for pad in (1, 0):
        out = jax.block_until_ready(convolution_block(x, w, b, gamma, beta, pad))
        ref = reference(x, w, b, gamma, beta, pad)
        L_out = L + 2 * pad - K + 1
        assert out.shape == (N, C_out, L_out), out.shape
        max_err = float(jnp.max(jnp.abs(out - ref)))
        assert jnp.allclose(out, ref, rtol=2e-4, atol=2e-4), (pad, max_err)

    print("KERNEL_OK")
</pallas_src>

<mosaic_0001>
module attributes {stable_mosaic.version = 11 : i64} {
  func.func @_conv_bn_relu_kernel(%arg0: i32, %arg1: memref<4x128xf32, #tpu.memory_space<vmem>>, %arg2: memref<8x12xf32, #tpu.memory_space<vmem>>, %arg3: memref<8x2xf32, #tpu.memory_space<vmem>>, %arg4: memref<8x128xf32, #tpu.memory_space<vmem>>, %arg5: memref<12x128xf32, #tpu.memory_space<vmem>>) attributes {dimension_semantics = [#tpu.dimension_semantics<parallel>], iteration_bounds = array<i64: 1>, scalar_prefetch = 0 : i64, scratch_operands = 1 : i64, tpu.core_type = #tpu.core_type<tc>, window_params = [{pipeline_mode = #tpu.pipeline_mode<synchronous>, transform_indices = @transform_0, window_bounds = array<i64: 4, 128>}, {transform_indices = @transform_1, window_bounds = array<i64: 8, 12>}, {transform_indices = @transform_2, window_bounds = array<i64: 8, 2>}, {transform_indices = @transform_3, window_bounds = array<i64: 8, 128>}]} {
    %c0 = arith.constant 0 : index
    %c0_0 = arith.constant 0 : index
    %0 = vector.load %arg1[%c0, %c0_0] : memref<4x128xf32, #tpu.memory_space<vmem>>, vector<4x128xf32>
    %1 = tpu.iota {dimensions = array<i32: 1>} : vector<4x128xi32>
    %c64_i32 = arith.constant 64 : i32
    %c0_i32 = arith.constant 0 : i32
    %2 = arith.cmpi eq, %c64_i32, %c0_i32 : i32
    %c1_i32 = arith.constant 1 : i32
    %3 = arith.select %2, %c1_i32, %c64_i32 : i32
    %4 = vector.broadcast %3 : i32 to vector<4x128xi32>
    %5 = arith.remsi %1, %4 : vector<4x128xi32>
    %c0_i32_1 = arith.constant 0 : i32
    %6 = vector.broadcast %c0_i32_1 : i32 to vector<4x128xi32>
    %7 = arith.cmpi ne, %5, %6 : vector<4x128xi32>
    %c0_i32_2 = arith.constant 0 : i32
    %8 = vector.broadcast %c0_i32_2 : i32 to vector<4x128xi32>
    %9 = arith.cmpi slt, %5, %8 : vector<4x128xi32>
    %c0_i32_3 = arith.constant 0 : i32
    %10 = arith.cmpi slt, %3, %c0_i32_3 : i32
    %11 = vector.broadcast %10 : i1 to vector<4x128xi1>
    %12 = vector.broadcast %11 : vector<4x128xi1> to vector<4x128xi1>
    %13 = arith.xori %9, %12 : vector<4x128xi1>
    %14 = arith.andi %13, %7 : vector<4x128xi1>
    %15 = vector.broadcast %3 : i32 to vector<4x128xi32>
    %16 = arith.addi %5, %15 : vector<4x128xi32>
    %17 = arith.select %14, %16, %5 : vector<4x128xi1>, vector<4x128xi32>
    %c1_i32_4 = arith.constant 1 : i32
    %18 = tpu.dynamic_rotate %0 by %c1_i32_4 dim 1 : vector<4x128xf32>, i32 -> vector<4x128xf32>
    %c1_i32_5 = arith.constant 1 : i32
    %19 = vector.broadcast %c1_i32_5 : i32 to vector<4x128xi32>
    %20 = arith.cmpi sge, %17, %19 : vector<4x128xi32>
    %c65_i32 = arith.constant 65 : i32
    %21 = vector.broadcast %c65_i32 : i32 to vector<4x128xi32>
    %22 = arith.cmpi slt, %17, %21 : vector<4x128xi32>
    %23 = arith.andi %20, %22 : vector<4x128xi1>
    %cst = arith.constant 0.000000e+00 : f32
    %24 = vector.broadcast %cst : f32 to vector<4x128xf32>
    %25 = arith.select %23, %18, %24 : vector<4x128xi1>, vector<4x128xf32>
    %c0_6 = arith.constant 0 : index
    %c0_7 = arith.constant 0 : index
    %26 = vector.load %arg5[%c0_6, %c0_7] : memref<12x128xf32, #tpu.memory_space<vmem>>, vector<4x128xf32>
    tpu.vector_store %arg5[%c0_6, %c0_7], %25 {strides = array<i32>} : memref<12x128xf32, #tpu.memory_space<vmem>>, vector<4x128xf32>,
    %c4 = arith.constant 4 : index
    %c0_8 = arith.constant 0 : index
    %27 = vector.load %arg5[%c4, %c0_8] : memref<12x128xf32, #tpu.memory_space<vmem>>, vector<4x128xf32>
    tpu.vector_store %arg5[%c4, %c0_8], %0 {strides = array<i32>} : memref<12x128xf32, #tpu.memory_space<vmem>>, vector<4x128xf32>,
    %c127_i32 = arith.constant 127 : i32
    %28 = tpu.dynamic_rotate %0 by %c127_i32 dim 1 : vector<4x128xf32>, i32 -> vector<4x128xf32>
    %c-1_i32 = arith.constant -1 : i32
    %29 = vector.broadcast %c-1_i32 : i32 to vector<4x128xi32>
    %30 = arith.cmpi sge, %17, %29 : vector<4x128xi32>
    %c63_i32 = arith.constant 63 : i32
    %31 = vector.broadcast %c63_i32 : i32 to vector<4x128xi32>
    %32 = arith.cmpi slt, %17, %31 : vector<4x128xi32>
    %33 = arith.andi %30, %32 : vector<4x128xi1>
    %cst_9 = arith.constant 0.000000e+00 : f32
    %34 = vector.broadcast %cst_9 : f32 to vector<4x128xf32>
    %35 = arith.select %33, %28, %34 : vector<4x128xi1>, vector<4x128xf32>
    %c8 = arith.constant 8 : index
    %c0_10 = arith.constant 0 : index
    %36 = vector.load %arg5[%c8, %c0_10] : memref<12x128xf32, #tpu.memory_space<vmem>>, vector<4x128xf32>
    tpu.vector_store %arg5[%c8, %c0_10], %35 {strides = array<i32>} : memref<12x128xf32, #tpu.memory_space<vmem>>, vector<4x128xf32>,
    %c0_11 = arith.constant 0 : index
    %c0_12 = arith.constant 0 : index
    %37 = vector.load %arg2[%c0_11, %c0_12] : memref<8x12xf32, #tpu.memory_space<vmem>>, vector<8x12xf32>
    %c0_13 = arith.constant 0 : index
    %c0_14 = arith.constant 0 : index
    %38 = vector.load %arg5[%c0_13, %c0_14] : memref<12x128xf32, #tpu.memory_space<vmem>>, vector<12x128xf32>
    %cst_15 = arith.constant dense<0.000000e+00> : vector<8x128xf32>
    %39 = tpu.matmul %37, %38, %cst_15 {dimension_numbers = #tpu.dot_dimension_numbers<[1], [0], [0], [1], [0, 0, 1, 1], [], []>} : vector<8x12xf32>, vector<12x128xf32>, vector<8x128xf32> -> vector<8x128xf32>
    %cst_16 = arith.constant dense<0.000000e+00> : vector<8xf32>
    %40 = vector.multi_reduction <add>, %39, %cst_16 [1] : vector<8x128xf32> to vector<8xf32>
    %41 = vector.shape_cast %40 : vector<8xf32> to vector<8x1xf32>
    %42 = arith.mulf %39, %39 : vector<8x128xf32>
    %cst_17 = arith.constant dense<0.000000e+00> : vector<8xf32>
    %43 = vector.multi_reduction <add>, %42, %cst_17 [1] : vector<8x128xf32> to vector<8xf32>
    %44 = vector.shape_cast %43 : vector<8xf32> to vector<8x1xf32>
    %cst_18 = arith.constant 7.812500e-03 : f32
    %45 = vector.broadcast %cst_18 : f32 to vector<8x1xf32>
    %46 = arith.mulf %41, %45 : vector<8x1xf32>
    %cst_19 = arith.constant 7.812500e-03 : f32
    %47 = vector.broadcast %cst_19 : f32 to vector<8x1xf32>
    %48 = arith.mulf %44, %47 : vector<8x1xf32>
    %49 = arith.mulf %46, %46 : vector<8x1xf32>
    %50 = arith.subf %48, %49 : vector<8x1xf32>
    %cst_20 = arith.constant 9.99999974E-6 : f32
    %51 = vector.broadcast %cst_20 : f32 to vector<8x1xf32>
    %52 = arith.addf %50, %51 : vector<8x1xf32>
    %53 = math.rsqrt %52 : vector<8x1xf32>
    %c0_21 = arith.constant 0 : index
    %c0_22 = arith.constant 0 : index
    %54 = vector.load %arg3[%c0_21, %c0_22] : memref<8x2xf32, #tpu.memory_space<vmem>>, vector<8x1xf32>
    %c0_23 = arith.constant 0 : index
    %c1 = arith.constant 1 : index
    %55 = vector.load %arg3[%c0_23, %c1] : memref<8x2xf32, #tpu.memory_space<vmem>>, vector<8x1xf32>
    %56 = arith.mulf %54, %53 : vector<8x1xf32>
    %57 = arith.mulf %46, %56 : vector<8x1xf32>
    %58 = arith.subf %55, %57 : vector<8x1xf32>
    %59 = vector.broadcast %56 : vector<8x1xf32> to vector<8x128xf32>
    %60 = arith.mulf %39, %59 : vector<8x128xf32>
    %61 = vector.broadcast %58 : vector<8x1xf32> to vector<8x128xf32>
    %62 = arith.addf %60, %61 : vector<8x128xf32>
    %cst_24 = arith.constant 0.000000e+00 : f32
    %63 = vector.broadcast %cst_24 : f32 to vector<8x128xf32>
    %64 = arith.maximumf %62, %63 : vector<8x128xf32>
    %c0_25 = arith.constant 0 : index
    %c0_26 = arith.constant 0 : index
    %65 = vector.load %arg4[%c0_25, %c0_26] : memref<8x128xf32, #tpu.memory_space<vmem>>, vector<8x128xf32>
    tpu.vector_store %arg4[%c0_25, %c0_26], %64 {strides = array<i32>} : memref<8x128xf32, #tpu.memory_space<vmem>>, vector<8x128xf32>,
    return
  }
  func.func @transform_0(%arg0: i32) -> (i32, i32) {
    %c0_i32 = arith.constant 0 : i32
    %c0_i32_0 = arith.constant 0 : i32
    %c0_i32_1 = arith.constant 0 : i32
    return %c0_i32, %c0_i32_0 : i32, i32
  }
  func.func @transform_1(%arg0: i32) -> (i32, i32) {
    %c0_i32 = arith.constant 0 : i32
    %c0_i32_0 = arith.constant 0 : i32
    return %arg0, %c0_i32 : i32, i32
  }
  func.func @transform_2(%arg0: i32) -> (i32, i32) {
    %c0_i32 = arith.constant 0 : i32
    %c0_i32_0 = arith.constant 0 : i32
    return %arg0, %c0_i32 : i32, i32
  }
  func.func @transform_3(%arg0: i32) -> (i32, i32) {
    %c0_i32 = arith.constant 0 : i32
    %c0_i32_0 = arith.constant 0 : i32
    return %arg0, %c0_i32 : i32, i32
  }
}

</mosaic_0001>

<llo_original>
// kernel: tpu_custom_call.1
$region0: #{tpu_custom_call.1}
  #allocation0 [shape = 'u32[]', space=smem, size = 0x4, offset = 0x4, fixed_abs, tag = 'smem constant byte address 0x4 - core index']
  #allocation1 [shape = 'u32[144,128]{1,0:T(1,128)}', space=vmem, size = 0x12000, scoped, tag = 'internal scratch']
  #allocation2 [shape = 'f32[12,128]{1,0:T(8,128)}', space=vmem, size = 0x2000, scoped, tag = 'scratch operand']
  %s0 = inlined_call_operand.vmem [shape: f32[4,128], index: 0, kind: input, shape index: {}]
  %s1 = inlined_call_operand.vmem [shape: f32[8,12], index: 1, kind: input, shape index: {}]
  %s2 = inlined_call_operand.vmem [shape: f32[8,2], index: 2, kind: input, shape index: {}]
  %s3 = inlined_call_operand.hbm [shape: f32[8,128], index: 3, kind: output, shape index: {}]
  %s4 = sld [smem:[#allocation0]]
  $region22: #{tpu_custom_call.1} parent=0
    _
  %s6 = ssub.s32 1, %s4
  %s7 = scalar_select 0, %s6, %s4
  $region1: #{tpu_custom_call.1} parent=0
    #allocation3 [shape = 'u8[4096]{0}', space=vmem, size = 0x1000, scoped, tag = 'output window, operand 0, single buffered']
    #allocation4 [shape = 's32[1]{0}', space=sflag, size = 0x4, scoped, tag = 'scoped memory for tpu_custom_call.1']
    %8 = vsyncpa [#allocation4], 0
    // Predicated region
    $region2: #{tpu_custom_call.1} parent=1 // pred_check
      _
    $region3: #{tpu_custom_call.1} parent=1 // pred_check_branch
      %10 = sbr.rel (0) target = $region5
    $region4: #{tpu_custom_call.1} parent=1 // pred_region
      _
    $region5: #{tpu_custom_call.1} parent=1 // pred_fallthru
      _
    // Predicated region
    $region6: #{tpu_custom_call.1} parent=1 // pred_check
      _
    $region7: #{tpu_custom_call.1} parent=1 // pred_check_branch
      %12 = sbr.rel (0) target = $region9
    $region8: #{tpu_custom_call.1} parent=1 // pred_region
      _
    $region9: #{tpu_custom_call.1} parent=1 // pred_fallthru
      _
    // Predicated region
    $region10: #{tpu_custom_call.1} parent=1 // pred_check
      _
    $region11: #{tpu_custom_call.1} parent=1 // pred_check_branch
      %14 = sbr.rel (0) target = $region13
    $region12: #{tpu_custom_call.1} parent=1 // pred_region
      _
    $region13: #{tpu_custom_call.1} parent=1 // pred_fallthru
      _
    %v15 = vld [vmem:[%s0] sm:$0xf]
    %v16 = vlaneseq
    %v17 = vand.u32 %v16, 127
    %vm18 = vcmp.lt.s32.totalorder %v17, 0
    %v19 = vsub.s32 0, %v17
    %v20 = vsel %vm18, %v19, %v17
    %v21 = vshrl.u32 %v20, 6
    %v22 = vand.u32 %v20, 63
    %v23 = vsub.s32 0, %v22
    %v24 = vsel %vm18, %v23, %v22
    %vm25 = vcmp.ne.s32.totalorder %v24, 0
    %vm26 = vcmp.lt.s32.totalorder %v24, 0
    %vm27 = vmand %vm26, %vm25
    %v28 = vadd.s32 %v24, 64
    %v29 = vsel %vm27, %v28, %v24
    %30 = vrot.lane.b32.xlu0 %v15, 1
    %v31 = vpop.permute.xlu0 %30
    %vm32 = vcmp.ge.s32.totalorder %v29, 1
    %vm33 = vcmp.lt.s32.totalorder %v29, 65
    %vm34 = vmand %vm32, %vm33
    %v35 = vsel %vm34, %v31, 0.0
    %36 = vst [vmem:[#allocation2] sm:$0xf] %v35
    %37 = vst [vmem:[#allocation2 + $0x4] sm:$0xf] %v15
    %38 = vrot.lane.b32.xlu0 %v15, 127
    %v39 = vpop.permute.xlu0 %38
    %vm40 = vcmp.ge.s32.totalorder %v29, 4294967295
    %vm41 = vcmp.lt.s32.totalorder %v29, 63
    %vm42 = vmand %vm40, %vm41
    %v43 = vsel %vm42, %v39, 0.0
    %44 = vst [vmem:[#allocation2 + $0x8] sm:$0xf] %v43
    %v45 = vld [vmem:[%s1] sm:$0xff]
    %v46 = vld [vmem:[#allocation2] sm:$0xff]
    %v47 = vld [vmem:[#allocation2 + $0x8] sm:$0xf]
    %vm48 = vcmask 97280
    %v50 = vsel %vm48, %v45, 0
    %vm52 = vcmask 1043456
    %v54 = vsel %vm52, %v47, 0
    %56 = vmatprep.subr.mxu0 0.0
    %57 = vmatpush1.msra.mxu0 %v46
    %58 = vmatprep.subr.mxu0 0.0
    %59 = vmatpush1.msra.mxu0 %v54
    %60 = vmatprep.subr.mxu0 0.0
    %61 = vmatpush1.msra.mxu0 0.0
    %62 = vmatprep.subr.mxu0 0.0
    %63 = vmatpush1.msra.mxu0 0.0
    %64 = vmatprep.subr.mxu0 0.0
    %65 = vmatpush1.msra.mxu0 0.0
    %66 = vmatprep.subr.mxu0 0.0
    %67 = vmatpush1.msra.mxu0 0.0
    %68 = vmatprep.subr.mxu0 0.0
    %69 = vmatpush1.msra.mxu0 0.0
    %70 = vmatprep.subr.mxu0 0.0
    %71 = vmatpush1.msra.mxu0 0.0
    %72 = vmatprep.subr.mxu0 0.0
    %73 = vmatpush1.msra.mxu0 0.0
    %74 = vmatprep.subr.mxu0 0.0
    %75 = vmatpush1.msra.mxu0 0.0
    %76 = vmatprep.subr.mxu0 0.0
    %77 = vmatpush1.msra.mxu0 0.0
    %78 = vmatprep.subr.mxu0 0.0
    %79 = vmatpush1.msra.mxu0 0.0
    %80 = vmatprep.subr.mxu0 0.0
    %81 = vmatpush1.msra.mxu0 0.0
    %82 = vmatprep.subr.mxu0 0.0
    %83 = vmatpush1.msra.mxu0 0.0
    %84 = vmatprep.subr.mxu0 0.0
    %85 = vmatpush1.msra.mxu0 0.0
    %86 = vmatprep.subr.mxu0 0.0
    %87 = vmatpush1.msra.mxu0 0.0
    %88 = vmatprep.subr.mxu0 0.0
    %89 = vmatpush1.msra.mxu0 0.0
    %90 = vmatprep.subr.mxu0 0.0
    %91 = vmatpush1.msra.mxu0 0.0
    %92 = vmatprep.subr.mxu0 0.0
    %93 = vmatpush1.msra.mxu0 0.0
    %94 = vmatprep.subr.mxu0 0.0
    %95 = vmatpush1.msra.mxu0 0.0
    %96 = vmatprep.subr.mxu0 0.0
    %97 = vmatpush1.msra.mxu0 0.0
    %98 = vmatprep.subr.mxu0 0.0
    %99 = vmatpush1.msra.mxu0 0.0
    %100 = vmatprep.subr.mxu0 0.0
    %101 = vmatpush1.msra.mxu0 0.0
    %102 = vmatprep.subr.mxu0 0.0
    %103 = vmatpush1.msra.mxu0 0.0
    %104 = vmatprep.subr.mxu0 0.0
    %105 = vmatpush1.msra.mxu0 0.0
    %106 = vmatprep.subr.mxu0 0.0
    %107 = vmatpush1.msra.mxu0 0.0
    %108 = vmatprep.subr.mxu0 0.0
    %109 = vmatpush1.msra.mxu0 0.0
    %110 = vmatprep.subr.mxu0 0.0
    %111 = vmatpush1.msra.mxu0 0.0
    %112 = vmatprep.subr.mxu0 0.0
    %113 = vmatpush1.msra.mxu0 0.0
    %114 = vmatprep.subr.mxu0 0.0
    %115 = vmatpush1.msra.mxu0 0.0
    %116 = vmatprep.subr.mxu0 0.0
    %117 = vmatpush1.msra.mxu0 0.0
    %118 = vmatprep.subr.mxu0 0.0
    %119 = vmatpush1.msra.mxu0 0.0
    %120 = vmatprep.mubr.f32.mxu0 0.0
    %121 = vmatmul.mubr.f32.gmra.mrb[0].mxu0 %v50
    %v122 = vpop.f32.mrb[0].mxu0
    %v123 = vadd.f32 0.0, %v122
    %v124 = vpop.f32.mrb[0].mxu0
    %125 = vdwg.mxu0
    %126 = vadd.xlane.f32.xlu0 %v123
    %v127 = vpop.xlane.xlu0 %126
    %v128 = vmul.f32 %v123, %v123
    %129 = vadd.xlane.f32.xlu0 %v128
    %v130 = vpop.xlane.xlu0 %129
    %v131 = vmul.f32 %v127, 0.0078125
    %v132 = vmul.f32 %v130, 0.0078125
    %v133 = vmul.f32 %v131, %v131
    %v134 = vsub.f32 %v132, %v133
    %v135 = vadd.f32 %v134, 1e-05
    %v136 = vrsqrt.pop %v135
    %v137 = vld [vmem:[%s2] sm:$0xff]
    %v138 = vmul.f32 %v137, %v136
    %v139 = vmul.f32 %v131, %v138
    %141 = vrot.lane.b32.xlu0 %v139, 1
    %v142 = vpop.permute.xlu0 %141
    %v144 = vsub.f32 %v137, %v142
    %146 = vset.pattern.permute.xlu0 0
    %147 = vperm.xlu0 %146, %v138
    %v148 = vpop.permute.xlu0 %147
    %v150 = vmul.f32 %v123, %v148
    %152 = vset.pattern.permute.xlu0 1
    %153 = vperm.xlu0 %152, %v144
    %v154 = vpop.permute.xlu0 %153
    %v156 = vadd.f32 %v150, %v154
    %v157 = vmax.f32 %v156, 0.0
    %158 = vst [vmem:[#allocation3] sm:$0xff] %v157
    // Predicated region
    $region14: #{tpu_custom_call.1} parent=1 // pred_check
      _
    $region15: #{tpu_custom_call.1} parent=1 // pred_check_branch
      %160 = sbr.rel (0) target = $region17
    $region16: #{tpu_custom_call.1} parent=1 // pred_region
      %s162 = ssub.s32 128, 128
      %163 = vsyncadd [#allocation4], %s162
      %s165 = sshll.u32 [#allocation3], 4
      %s166 = int_to_ptr.vmem [resolvable:$true] %s165
      %168 = dma.vmem_to_hbm [thread:$0]  %s166, 128, %s3, [#allocation4]
    $region17: #{tpu_custom_call.1} parent=1 // pred_fallthru
      _
    // Predicated region
    $region18: #{tpu_custom_call.1} parent=1 // pred_check
      _
    $region19: #{tpu_custom_call.1} parent=1 // pred_check_branch
      %170 = sbr.rel (0) target = $region21
    $region20: #{tpu_custom_call.1} parent=1 // pred_region
      %171 = dma.done [#allocation4], 128
    $region21: #{tpu_custom_call.1} parent=1 // pred_fallthru
      _
    %172 = vsyncpa [#allocation4], 1

</llo_original>
